<compile_context>
chip_gen: v7x
topology: tpu7x:2x2x1
jax: 0.10.0
libtpu: 0.0.40
codegen_flags: <defaults>
</compile_context>

<pallas_src>
import jax
import jax.numpy as jnp
from jax.experimental import pallas as pl
from jax.experimental.pallas import tpu as pltpu

_LANE = 128   # vreg lane width (last dim)
_SUBLANE = 8  # vreg sublane width (second-to-last dim)


def _round_up(n, m):
    return ((n + m - 1) // m) * m


def _cdiv(a, b):
    return -(-a // b)


def _sigmoid(z):
    # sigmoid(z) == 0.5 * tanh(0.5 * z) + 0.5 : a single EUP op (tanh), no
    # overflow path, exact math (unlike approx reciprocal).
    return 0.5 * jnp.tanh(0.5 * z) + 0.5


def _mlp_kernel(x_ref, w1_ref, b1_ref, w2_ref, b2_ref, o_ref, acc_ref):
    h = pl.program_id(1)

    @pl.when(h == 0)
    def _():
        acc_ref[...] = jnp.zeros_like(acc_ref)

    # Layer 1 on this hidden-dim chunk (bf16 MXU inputs, f32 accumulation).
    z1 = jnp.dot(x_ref[...], w1_ref[...], preferred_element_type=jnp.float32)
    a1 = _sigmoid(z1 + b1_ref[...])          # (TB, TH) f32
    # Layer-2 partial product, accumulated across hidden chunks.
    acc_ref[...] += jnp.dot(a1.astype(jnp.bfloat16), w2_ref[...],
                            preferred_element_type=jnp.float32)

    @pl.when(h == pl.num_programs(1) - 1)
    def _():
        o_ref[...] = _sigmoid(acc_ref[...] + b2_ref[...]).astype(o_ref.dtype)


def _vmem_budget_bytes():
    try:
        cap = int(pltpu.get_tpu_info().vmem_capacity_bytes)
    except Exception:
        cap = 64 << 20  # fall back to the tightest generation (v7x per-TC)
    return int(0.75 * cap)


def make_mlp_forward(w1, b1, w2, b2):
    """One-time parameter prep (pad + bf16 cast); returns a jitted forward(x).

    w1: (D_in, H), b1: (1, H), w2: (H, D_out), b2: (1, D_out)  -- torch weight.T layout.
    """
    D_in, H = w1.shape
    D_out = w2.shape[1]
    b1 = jnp.reshape(b1, (1, H))
    b2 = jnp.reshape(b2, (1, D_out))

    # Lane-dense padding of all feature dims (no masked partial stores).
    D_in_p = _round_up(D_in, _LANE)
    H_p = _round_up(H, _LANE)
    D_out_p = _round_up(D_out, _LANE)

    budget = _vmem_budget_bytes()

    # Resident bytes for one hidden-dim chunk of weights/biases, counting the
    # default 2x pipeline buffering even for constant-index blocks.
    def _resident_bytes(th):
        return 2 * ((D_in_p * th + th * D_out_p) * 2 + (th + D_out_p) * 4)

    # Hidden-chunk size: fully resident if it fits ~half the VMEM budget,
    # otherwise tile H along a trailing "arbitrary" grid axis.
    weight_budget = budget // 2
    if _resident_bytes(H_p) <= weight_budget:
        TH = H_p
    else:
        TH = _LANE
        while _resident_bytes(TH + _LANE) <= weight_budget:
            TH += _LANE
    H_pp = _round_up(H_p, TH)
    n_h = H_pp // TH

    # Pad + cast parameters ONCE (not per forward call).  Padded H columns give
    # sigmoid(0)=0.5 but hit zero-padded W2 rows, so they contribute nothing.
    w1p = jnp.pad(w1.astype(jnp.bfloat16), ((0, D_in_p - D_in), (0, H_pp - H)))
    b1p = jnp.pad(b1.astype(jnp.float32), ((0, 0), (0, H_pp - H)))
    w2p = jnp.pad(w2.astype(jnp.bfloat16), ((0, H_pp - H), (0, D_out_p - D_out)))
    b2p = jnp.pad(b2.astype(jnp.float32), ((0, 0), (0, D_out_p - D_out)))

    resident = _resident_bytes(TH)
    # Per-batch-row VMEM: double-buffered x (bf16) and out (f32) tiles, f32
    # accumulator scratch, plus layer-1 f32/bf16 temporaries for one TH chunk.
    per_row = 2 * D_in_p * 2 + 2 * D_out_p * 4 + D_out_p * 4 + TH * 6

    @jax.jit
    def forward(x):
        B = x.shape[0]
        B_sub = _round_up(B, _SUBLANE)

        # Batch tile from the VMEM budget (sweet spot <= 1024 rows); pick the
        # tile count so we never pad a nearly-empty extra tile, and split
        # medium/large batches into >= 2 "parallel" steps (v7x megacore).
        tb_cap = max(_SUBLANE,
                     ((budget - resident) // max(per_row, 1)) // _SUBLANE * _SUBLANE)
        tb_cap = min(tb_cap, 1024, B_sub)
        min_tiles = 2 if B_sub >= 256 else 1
        n_b = max(_cdiv(B_sub, tb_cap), min_tiles)
        TB = _round_up(_cdiv(B_sub, n_b), _SUBLANE)
        n_b = _cdiv(B_sub, TB)
        B_p = n_b * TB

        # Single pad (zero fill) + bf16 cast of the activation input.
        xp = jnp.pad(x.astype(jnp.bfloat16), ((0, B_p - B), (0, D_in_p - D_in)))

        vmem_limit = int(min(max(2 * (resident + TB * per_row), 8 << 20), budget))

        out_p = pl.pallas_call(
            _mlp_kernel,
            out_shape=jax.ShapeDtypeStruct((B_p, D_out_p), jnp.float32),
            grid=(n_b, n_h),
            in_specs=[
                pl.BlockSpec((TB, D_in_p), lambda i, h: (i, 0)),    # x (resident across h)
                pl.BlockSpec((D_in_p, TH), lambda i, h: (0, h)),    # W1 column slab
                pl.BlockSpec((1, TH), lambda i, h: (0, h)),         # b1 slab
                pl.BlockSpec((TH, D_out_p), lambda i, h: (h, 0)),   # W2 row slab
                pl.BlockSpec((1, D_out_p), lambda i, h: (0, 0)),    # b2
            ],
            out_specs=pl.BlockSpec((TB, D_out_p), lambda i, h: (i, 0)),
            scratch_shapes=[pltpu.VMEM((TB, D_out_p), jnp.float32)],
            compiler_params=pltpu.CompilerParams(
                dimension_semantics=("parallel", "arbitrary"),
                vmem_limit_bytes=vmem_limit),
        )(xp, w1p, b1p, w2p, b2p)

        # Slice away batch / lane padding.
        return out_p[:B, :D_out]

    return forward


def init_linear_params(key, in_features, out_features):
    # Deterministic init mimicking torch.nn.Linear: U(-1/sqrt(in), 1/sqrt(in)).
    kw, kb = jax.random.split(key)
    bound = 1.0 / jnp.sqrt(jnp.float32(in_features))
    # Stored as (in_features, out_features) == torch weight.T
    w = jax.random.uniform(kw, (in_features, out_features), jnp.float32,
                           minval=-bound, maxval=bound)
    b = jax.random.uniform(kb, (1, out_features), jnp.float32,
                           minval=-bound, maxval=bound)
    return w, b


if __name__ == "__main__":
    batch, input_dim, hidden_dim, output_dim = 8, 16, 32, 8

    key = jax.random.PRNGKey(0)
    kx, k1, k2 = jax.random.split(key, 3)

    x = jax.random.normal(kx, (batch, input_dim), jnp.float32)
    w1, b1 = init_linear_params(k1, input_dim, hidden_dim)
    w2, b2 = init_linear_params(k2, hidden_dim, output_dim)

    forward = make_mlp_forward(w1, b1, w2, b2)   # one-time param prep
    y = forward(x)
    jax.block_until_ready(y)

    # Pure-JAX f32 reference; tolerance covers bf16 MXU inputs (the tanh-form
    # sigmoid itself is exact).
    ref = jax.nn.sigmoid(jax.nn.sigmoid(x @ w1 + b1) @ w2 + b2)
    assert y.shape == ref.shape
    assert jnp.allclose(y, ref, atol=1e-2), "mismatch vs reference"

    print("KERNEL_OK")
</pallas_src>

<mosaic_0001>
module attributes {stable_mosaic.version = 11 : i64} {
  func.func @_mlp_kernel(%arg0: i32, %arg1: i32, %arg2: memref<8x128xbf16, #tpu.memory_space<vmem>>, %arg3: memref<128x128xbf16, #tpu.memory_space<vmem>>, %arg4: memref<1x128xf32, #tpu.memory_space<vmem>>, %arg5: memref<128x128xbf16, #tpu.memory_space<vmem>>, %arg6: memref<1x128xf32, #tpu.memory_space<vmem>>, %arg7: memref<8x128xf32, #tpu.memory_space<vmem>>, %arg8: memref<8x128xf32, #tpu.memory_space<vmem>>) attributes {dimension_semantics = [#tpu.dimension_semantics<parallel>, #tpu.dimension_semantics<arbitrary>], iteration_bounds = array<i64: 1, 1>, scalar_prefetch = 0 : i64, scratch_operands = 1 : i64, tpu.core_type = #tpu.core_type<tc>, window_params = [{transform_indices = @transform_0, window_bounds = array<i64: 8, 128>}, {transform_indices = @transform_1, window_bounds = array<i64: 128, 128>}, {transform_indices = @transform_2, window_bounds = array<i64: 1, 128>}, {transform_indices = @transform_3, window_bounds = array<i64: 128, 128>}, {pipeline_mode = #tpu.pipeline_mode<synchronous>, transform_indices = @transform_4, window_bounds = array<i64: 1, 128>}, {transform_indices = @transform_5, window_bounds = array<i64: 8, 128>}]} {
    %c0_i32 = arith.constant 0 : i32
    %0 = arith.cmpi eq, %arg1, %c0_i32 : i32
    %1 = arith.extui %0 : i1 to i32
    %c0_i32_0 = arith.constant 0 : i32
    %2 = arith.cmpi ne, %1, %c0_i32_0 : i32
    scf.if %2 {
      %cst_18 = arith.constant 0.000000e+00 : f32
      %25 = vector.broadcast %cst_18 : f32 to vector<8x128xf32>
      %c0_19 = arith.constant 0 : index
      %c0_20 = arith.constant 0 : index
      %26 = vector.load %arg8[%c0_19, %c0_20] : memref<8x128xf32, #tpu.memory_space<vmem>>, vector<8x128xf32>
      tpu.vector_store %arg8[%c0_19, %c0_20], %25 {strides = array<i32>} : memref<8x128xf32, #tpu.memory_space<vmem>>, vector<8x128xf32>,
    } else {
    }
    %c0 = arith.constant 0 : index
    %c0_1 = arith.constant 0 : index
    %3 = vector.load %arg2[%c0, %c0_1] : memref<8x128xbf16, #tpu.memory_space<vmem>>, vector<8x128xbf16>
    %c0_2 = arith.constant 0 : index
    %c0_3 = arith.constant 0 : index
    %4 = vector.load %arg3[%c0_2, %c0_3] : memref<128x128xbf16, #tpu.memory_space<vmem>>, vector<128x128xbf16>
    %cst = arith.constant dense<0.000000e+00> : vector<8x128xf32>
    %5 = tpu.matmul %3, %4, %cst {dimension_numbers = #tpu.dot_dimension_numbers<[1], [0], [0], [1], [0, 0, 1, 1], [], []>} : vector<8x128xbf16>, vector<128x128xbf16>, vector<8x128xf32> -> vector<8x128xf32>
    %c0_4 = arith.constant 0 : index
    %c0_5 = arith.constant 0 : index
    %6 = vector.load %arg4[%c0_4, %c0_5] : memref<1x128xf32, #tpu.memory_space<vmem>>, vector<1x128xf32>
    %7 = vector.broadcast %6 : vector<1x128xf32> to vector<8x128xf32>
    %8 = arith.addf %5, %7 : vector<8x128xf32>
    %cst_6 = arith.constant 5.000000e-01 : f32
    %9 = vector.broadcast %cst_6 : f32 to vector<8x128xf32>
    %10 = arith.mulf %9, %8 : vector<8x128xf32>
    %11 = math.tanh %10 : vector<8x128xf32>
    %cst_7 = arith.constant 5.000000e-01 : f32
    %12 = vector.broadcast %cst_7 : f32 to vector<8x128xf32>
    %13 = arith.mulf %12, %11 : vector<8x128xf32>
    %cst_8 = arith.constant 5.000000e-01 : f32
    %14 = vector.broadcast %cst_8 : f32 to vector<8x128xf32>
    %15 = arith.addf %13, %14 : vector<8x128xf32>
    %c0_9 = arith.constant 0 : index
    %c0_10 = arith.constant 0 : index
    %16 = vector.load %arg8[%c0_9, %c0_10] : memref<8x128xf32, #tpu.memory_space<vmem>>, vector<8x128xf32>
    %17 = arith.truncf %15 : vector<8x128xf32> to vector<8x128xbf16>
    %c0_11 = arith.constant 0 : index
    %c0_12 = arith.constant 0 : index
    %18 = vector.load %arg5[%c0_11, %c0_12] : memref<128x128xbf16, #tpu.memory_space<vmem>>, vector<128x128xbf16>
    %cst_13 = arith.constant dense<0.000000e+00> : vector<8x128xf32>
    %19 = tpu.matmul %17, %18, %cst_13 {dimension_numbers = #tpu.dot_dimension_numbers<[1], [0], [0], [1], [0, 0, 1, 1], [], []>} : vector<8x128xbf16>, vector<128x128xbf16>, vector<8x128xf32> -> vector<8x128xf32>
    %20 = arith.addf %16, %19 : vector<8x128xf32>
    %c0_14 = arith.constant 0 : index
    %c0_15 = arith.constant 0 : index
    %21 = vector.load %arg8[%c0_14, %c0_15] : memref<8x128xf32, #tpu.memory_space<vmem>>, vector<8x128xf32>
    tpu.vector_store %arg8[%c0_14, %c0_15], %20 {strides = array<i32>} : memref<8x128xf32, #tpu.memory_space<vmem>>, vector<8x128xf32>,
    %c0_i32_16 = arith.constant 0 : i32
    %22 = arith.cmpi eq, %arg1, %c0_i32_16 : i32
    %23 = arith.extui %22 : i1 to i32
    %c0_i32_17 = arith.constant 0 : i32
    %24 = arith.cmpi ne, %23, %c0_i32_17 : i32
    scf.if %24 {
      %c0_18 = arith.constant 0 : index
      %c0_19 = arith.constant 0 : index
      %25 = vector.load %arg8[%c0_18, %c0_19] : memref<8x128xf32, #tpu.memory_space<vmem>>, vector<8x128xf32>
      %c0_20 = arith.constant 0 : index
      %c0_21 = arith.constant 0 : index
      %26 = vector.load %arg6[%c0_20, %c0_21] : memref<1x128xf32, #tpu.memory_space<vmem>>, vector<1x128xf32>
      %27 = vector.broadcast %26 : vector<1x128xf32> to vector<8x128xf32>
      %28 = arith.addf %25, %27 : vector<8x128xf32>
      %cst_22 = arith.constant 5.000000e-01 : f32
      %29 = vector.broadcast %cst_22 : f32 to vector<8x128xf32>
      %30 = arith.mulf %29, %28 : vector<8x128xf32>
      %31 = math.tanh %30 : vector<8x128xf32>
      %cst_23 = arith.constant 5.000000e-01 : f32
      %32 = vector.broadcast %cst_23 : f32 to vector<8x128xf32>
      %33 = arith.mulf %32, %31 : vector<8x128xf32>
      %cst_24 = arith.constant 5.000000e-01 : f32
      %34 = vector.broadcast %cst_24 : f32 to vector<8x128xf32>
      %35 = arith.addf %33, %34 : vector<8x128xf32>
      %c0_25 = arith.constant 0 : index
      %c0_26 = arith.constant 0 : index
      %36 = vector.load %arg7[%c0_25, %c0_26] : memref<8x128xf32, #tpu.memory_space<vmem>>, vector<8x128xf32>
      tpu.vector_store %arg7[%c0_25, %c0_26], %35 {strides = array<i32>} : memref<8x128xf32, #tpu.memory_space<vmem>>, vector<8x128xf32>,
    } else {
    }
    return
  }
  func.func @transform_0(%arg0: i32, %arg1: i32) -> (i32, i32) {
    %c0_i32 = arith.constant 0 : i32
    %c0_i32_0 = arith.constant 0 : i32
    return %arg0, %c0_i32 : i32, i32
  }
  func.func @transform_1(%arg0: i32, %arg1: i32) -> (i32, i32) {
    %c0_i32 = arith.constant 0 : i32
    %c0_i32_0 = arith.constant 0 : i32
    return %c0_i32, %arg1 : i32, i32
  }
  func.func @transform_2(%arg0: i32, %arg1: i32) -> (i32, i32) {
    %c0_i32 = arith.constant 0 : i32
    %c0_i32_0 = arith.constant 0 : i32
    return %c0_i32, %arg1 : i32, i32
  }
  func.func @transform_3(%arg0: i32, %arg1: i32) -> (i32, i32) {
    %c0_i32 = arith.constant 0 : i32
    %c0_i32_0 = arith.constant 0 : i32
    return %arg1, %c0_i32 : i32, i32
  }
  func.func @transform_4(%arg0: i32, %arg1: i32) -> (i32, i32) {
    %c0_i32 = arith.constant 0 : i32
    %c0_i32_0 = arith.constant 0 : i32
    %c0_i32_1 = arith.constant 0 : i32
    return %c0_i32, %c0_i32_0 : i32, i32
  }
  func.func @transform_5(%arg0: i32, %arg1: i32) -> (i32, i32) {
    %c0_i32 = arith.constant 0 : i32
    %c0_i32_0 = arith.constant 0 : i32
    return %arg0, %c0_i32 : i32, i32
  }
}

</mosaic_0001>

<llo_original>
// kernel: forward.1
$region0: #{forward.1}
  #allocation0 [shape = 'u32[]', space=smem, size = 0x4, offset = 0x4, fixed_abs, tag = 'smem constant byte address 0x4 - core index']
  #allocation1 [shape = 'u32[144,128]{1,0:T(1,128)}', space=vmem, size = 0x12000, scoped, tag = 'internal scratch']
  #allocation2 [shape = 'f32[8,128]{1,0:T(8,128)}', space=vmem, size = 0x1000, scoped, tag = 'scratch operand']
  %s0 = inlined_call_operand.vmem [shape: bf16[8,128], index: 0, kind: input, shape index: {}]
  %s1 = inlined_call_operand.hbm [shape: bf16[128,128], index: 1, kind: input, shape index: {}]
  %s2 = inlined_call_operand.vmem [shape: f32[1,128], index: 2, kind: input, shape index: {}]
  %s3 = inlined_call_operand.hbm [shape: bf16[128,128], index: 3, kind: input, shape index: {}]
  %s4 = inlined_call_operand.vmem [shape: f32[1,128], index: 4, kind: input, shape index: {}]
  %s5 = inlined_call_operand.hbm [shape: f32[8,128], index: 5, kind: output, shape index: {}]
  %s6 = sld [smem:[#allocation0]]
  $region46: #{forward.1} parent=0
    _
  %s8 = ssub.s32 1, %s6
  %s9 = scalar_select 0, %s8, %s6
  $region1: #{forward.1} parent=0
    #allocation3 [shape = 'u8[32768]{0}', space=vmem, size = 0x8000, scoped, tag = 'input window, operand 1, single buffered']
    #allocation4 [shape = 's32[1]{0}', space=sflag, size = 0x4, scoped, tag = 'scoped memory for forward.1']
    #allocation5 [shape = 's32[1]{0}', space=sflag, size = 0x4, scoped, tag = 'scoped memory for forward.1']
    #allocation6 [shape = 'u8[32768]{0}', space=vmem, size = 0x8000, scoped, tag = 'input window, operand 3, single buffered']
    #allocation7 [shape = 's32[1]{0}', space=sflag, size = 0x4, scoped, tag = 'scoped memory for forward.1']
    #allocation8 [shape = 'u8[4096]{0}', space=vmem, size = 0x1000, scoped, tag = 'output window, operand 0, single buffered']
    %10 = vsyncpa [#allocation4], 0
    %11 = vsyncpa [#allocation7], 0
    %12 = vsyncpa [#allocation5], 0
    // Predicated region
    $region2: #{forward.1} parent=1 // pred_check
      _
    $region3: #{forward.1} parent=1 // pred_check_branch
      %14 = sbr.rel (0) target = $region5
    $region4: #{forward.1} parent=1 // pred_region
      _
    $region5: #{forward.1} parent=1 // pred_fallthru
      _
    // Predicated region
    $region6: #{forward.1} parent=1 // pred_check
      _
    $region7: #{forward.1} parent=1 // pred_check_branch
      %16 = sbr.rel (0) target = $region9
    $region8: #{forward.1} parent=1 // pred_region
      %s18 = ssub.s32 1024, 1024
      %19 = vsyncadd [#allocation4], %s18
      %s20 = sshll.u32 [#allocation3], 4
      %s21 = int_to_ptr.vmem [resolvable:$true] %s20
      %26 = dma.hbm_to_vmem [thread:$0]  %s1, 1024, %s21, [#allocation4], 64, 64, 4
    $region9: #{forward.1} parent=1 // pred_fallthru
      _
    // Predicated region
    $region10: #{forward.1} parent=1 // pred_check
      _
    $region11: #{forward.1} parent=1 // pred_check_branch
      %28 = sbr.rel (0) target = $region13
    $region12: #{forward.1} parent=1 // pred_region
      _
    $region13: #{forward.1} parent=1 // pred_fallthru
      _
    // Predicated region
    $region14: #{forward.1} parent=1 // pred_check
      _
    $region15: #{forward.1} parent=1 // pred_check_branch
      %30 = sbr.rel (0) target = $region17
    $region16: #{forward.1} parent=1 // pred_region
      %s32 = ssub.s32 1024, 1024
      %33 = vsyncadd [#allocation7], %s32
      %s34 = sshll.u32 [#allocation6], 4
      %s35 = int_to_ptr.vmem [resolvable:$true] %s34
      %40 = dma.hbm_to_vmem [thread:$0]  %s3, 1024, %s35, [#allocation7], 64, 64, 4
    $region17: #{forward.1} parent=1 // pred_fallthru
      _
    // Predicated region
    $region18: #{forward.1} parent=1 // pred_check
      _
    $region19: #{forward.1} parent=1 // pred_check_branch
      %42 = sbr.rel (0) target = $region21
    $region20: #{forward.1} parent=1 // pred_region
      _
    $region21: #{forward.1} parent=1 // pred_fallthru
      _
    // Predicated region
    $region22: #{forward.1} parent=1 // pred_check
      _
    $region23: #{forward.1} parent=1 // pred_check_branch
      %44 = sbr.rel (0) target = $region25
    $region24: #{forward.1} parent=1 // pred_region
      %45 = dma.done [#allocation4], 1024
    $region25: #{forward.1} parent=1 // pred_fallthru
      _
    // Predicated region
    $region26: #{forward.1} parent=1 // pred_check
      _
    $region27: #{forward.1} parent=1 // pred_check_branch
      %47 = sbr.rel (0) target = $region29
    $region28: #{forward.1} parent=1 // pred_region
      %48 = dma.done [#allocation7], 1024
    $region29: #{forward.1} parent=1 // pred_fallthru
      _
    %p50 = scmp.eq.s32.totalorder 0, 0
    // Predicated region
    $region30: #{forward.1} parent=1 // pred_check
      %p51 = pneg %p50
    $region31: #{forward.1} parent=1 // pred_check_branch
      %53 = sbr.rel (%p51) target = $region33
    $region32: #{forward.1} parent=1 // pred_region
      %54 = vst [vmem:[#allocation2] sm:$0xff] 0.0
    $region33: #{forward.1} parent=1 // pred_fallthru
      _
    %v55 = vld [vmem:[%s0] sm:$0xf]
    %v56 = vld [vmem:[#allocation3] sm:$0xf]
    %v57 = vld [vmem:[#allocation3 + $0x4] sm:$0xf]
    %v58 = vld [vmem:[#allocation3 + $0x8] sm:$0xf]
    %v59 = vld [vmem:[#allocation3 + $0xc] sm:$0xf]
    %v60 = vld [vmem:[#allocation3 + $0x10] sm:$0xf]
    %v61 = vld [vmem:[#allocation3 + $0x14] sm:$0xf]
    %v62 = vld [vmem:[#allocation3 + $0x18] sm:$0xf]
    %v63 = vld [vmem:[#allocation3 + $0x1c] sm:$0xf]
    %v64 = vld [vmem:[#allocation3 + $0x20] sm:$0xf]
    %v65 = vld [vmem:[#allocation3 + $0x24] sm:$0xf]
    %v66 = vld [vmem:[#allocation3 + $0x28] sm:$0xf]
    %v67 = vld [vmem:[#allocation3 + $0x2c] sm:$0xf]
    %v68 = vld [vmem:[#allocation3 + $0x30] sm:$0xf]
    %v69 = vld [vmem:[#allocation3 + $0x34] sm:$0xf]
    %v70 = vld [vmem:[#allocation3 + $0x38] sm:$0xf]
    %v71 = vld [vmem:[#allocation3 + $0x3c] sm:$0xf]
    %v72 = vld [vmem:[%s2] sm:$0x1]
    %v74 = vlaneseq
    %v75 = vshrl.u32 %v74, 7
    %v76 = vsub.s32 0, %v75
    %v77 = vrot.slane %v72, %v76
    %v95 = vunpack.c.l.b16 %v56
    %v96 = vunpack.c.l.b16 %v57
    %v97 = vunpack.c.l.b16 %v58
    %v98 = vunpack.c.l.b16 %v59
    %v99 = vunpack.c.l.b16 %v60
    %v100 = vunpack.c.l.b16 %v61
    %v101 = vunpack.c.l.b16 %v62
    %v102 = vunpack.c.l.b16 %v63
    %v103 = vunpack.c.l.b16 %v64
    %v104 = vunpack.c.l.b16 %v65
    %v105 = vunpack.c.l.b16 %v66
    %v106 = vunpack.c.l.b16 %v67
    %v107 = vunpack.c.l.b16 %v68
    %v108 = vunpack.c.l.b16 %v69
    %v109 = vunpack.c.l.b16 %v70
    %v110 = vunpack.c.l.b16 %v71
    %v111 = vpack.c.b16 %v96, %v95
    %v112 = vpack.c.b16 %v98, %v97
    %v113 = vpack.c.b16 %v100, %v99
    %v114 = vpack.c.b16 %v102, %v101
    %v115 = vpack.c.b16 %v104, %v103
    %v116 = vpack.c.b16 %v106, %v105
    %v117 = vpack.c.b16 %v108, %v107
    %v118 = vpack.c.b16 %v110, %v109
    %127 = vmatprep.subr.bf16.mxu0 0
    %128 = vmatpush1.bf16.msra.mxu0 %v111
    %129 = vmatprep.subr.bf16.mxu0 0
    %130 = vmatpush1.bf16.msra.mxu0 %v112
    %131 = vmatprep.subr.bf16.mxu0 0
    %132 = vmatpush1.bf16.msra.mxu0 %v113
    %133 = vmatprep.subr.bf16.mxu0 0
    %134 = vmatpush1.bf16.msra.mxu0 %v114
    %135 = vmatprep.subr.bf16.mxu0 0
    %136 = vmatpush1.bf16.msra.mxu0 %v115
    %137 = vmatprep.subr.bf16.mxu0 0
    %138 = vmatpush1.bf16.msra.mxu0 %v116
    %139 = vmatprep.subr.bf16.mxu0 0
    %140 = vmatpush1.bf16.msra.mxu0 %v117
    %141 = vmatprep.subr.bf16.mxu0 0
    %142 = vmatpush1.bf16.msra.mxu0 %v118
    %143 = vmatprep.subr.bf16.mxu0 0
    %144 = vmatpush1.bf16.msra.mxu0 0
    %145 = vmatprep.subr.bf16.mxu0 0
    %146 = vmatpush1.bf16.msra.mxu0 0
    %147 = vmatprep.subr.bf16.mxu0 0
    %148 = vmatpush1.bf16.msra.mxu0 0
    %149 = vmatprep.subr.bf16.mxu0 0
    %150 = vmatpush1.bf16.msra.mxu0 0
    %151 = vmatprep.subr.bf16.mxu0 0
    %152 = vmatpush1.bf16.msra.mxu0 0
    %153 = vmatprep.subr.bf16.mxu0 0
    %154 = vmatpush1.bf16.msra.mxu0 0
    %155 = vmatprep.subr.bf16.mxu0 0
    %156 = vmatpush1.bf16.msra.mxu0 0
    %157 = vmatprep.subr.bf16.mxu0 0
    %158 = vmatpush1.bf16.msra.mxu0 0
    %159 = vmatprep.mubr.bf16.mxu0 0
    %160 = vmatmul.mubr.bf16.gmra.mrb[0].mxu0 %v55
    %v161 = vpop.f32.mrb[0].mxu0
    %v162 = vadd.f32 %v77, %v161
    %v163 = vpop.f32.mrb[0].mxu0
    %v164 = vpop.f32.mrb[0].mxu0
    %v165 = vpop.f32.mrb[0].mxu0
    %166 = vdwg.mxu0
    %v167 = vmul.f32 %v162, 0.5
    %v168 = vtanh.pop %v167
    %v169 = vmul.f32 %v168, 0.5
    %v170 = vadd.f32 %v169, 0.5
    %v171 = vld [vmem:[#allocation2] sm:$0xff]
    %v172 = vpack.c.bf16 %v170, %v170
    %v173 = vld [vmem:[#allocation6] sm:$0xf]
    %v174 = vld [vmem:[#allocation6 + $0x4] sm:$0xf]
    %v175 = vld [vmem:[#allocation6 + $0x8] sm:$0xf]
    %v176 = vld [vmem:[#allocation6 + $0xc] sm:$0xf]
    %v177 = vld [vmem:[#allocation6 + $0x10] sm:$0xf]
    %v178 = vld [vmem:[#allocation6 + $0x14] sm:$0xf]
    %v179 = vld [vmem:[#allocation6 + $0x18] sm:$0xf]
    %v180 = vld [vmem:[#allocation6 + $0x1c] sm:$0xf]
    %v181 = vld [vmem:[#allocation6 + $0x20] sm:$0xf]
    %v182 = vld [vmem:[#allocation6 + $0x24] sm:$0xf]
    %v183 = vld [vmem:[#allocation6 + $0x28] sm:$0xf]
    %v184 = vld [vmem:[#allocation6 + $0x2c] sm:$0xf]
    %v185 = vld [vmem:[#allocation6 + $0x30] sm:$0xf]
    %v186 = vld [vmem:[#allocation6 + $0x34] sm:$0xf]
    %v187 = vld [vmem:[#allocation6 + $0x38] sm:$0xf]
    %v188 = vld [vmem:[#allocation6 + $0x3c] sm:$0xf]
    %v205 = vunpack.c.l.b16 %v173
    %v206 = vunpack.c.l.b16 %v174
    %v207 = vunpack.c.l.b16 %v175
    %v208 = vunpack.c.l.b16 %v176
    %v209 = vunpack.c.l.b16 %v177
    %v210 = vunpack.c.l.b16 %v178
    %v211 = vunpack.c.l.b16 %v179
    %v212 = vunpack.c.l.b16 %v180
    %v213 = vunpack.c.l.b16 %v181
    %v214 = vunpack.c.l.b16 %v182
    %v215 = vunpack.c.l.b16 %v183
    %v216 = vunpack.c.l.b16 %v184
    %v217 = vunpack.c.l.b16 %v185
    %v218 = vunpack.c.l.b16 %v186
    %v219 = vunpack.c.l.b16 %v187
    %v220 = vunpack.c.l.b16 %v188
    %v221 = vpack.c.b16 %v206, %v205
    %v222 = vpack.c.b16 %v208, %v207
    %v223 = vpack.c.b16 %v210, %v209
    %v224 = vpack.c.b16 %v212, %v211
    %v225 = vpack.c.b16 %v214, %v213
    %v226 = vpack.c.b16 %v216, %v215
    %v227 = vpack.c.b16 %v218, %v217
    %v228 = vpack.c.b16 %v220, %v219
    %237 = vmatprep.subr.bf16.mxu0 0
    %238 = vmatpush1.bf16.msra.mxu0 %v221
    %239 = vmatprep.subr.bf16.mxu0 0
    %240 = vmatpush1.bf16.msra.mxu0 %v222
    %241 = vmatprep.subr.bf16.mxu0 0
    %242 = vmatpush1.bf16.msra.mxu0 %v223
    %243 = vmatprep.subr.bf16.mxu0 0
    %244 = vmatpush1.bf16.msra.mxu0 %v224
    %245 = vmatprep.subr.bf16.mxu0 0
    %246 = vmatpush1.bf16.msra.mxu0 %v225
    %247 = vmatprep.subr.bf16.mxu0 0
    %248 = vmatpush1.bf16.msra.mxu0 %v226
    %249 = vmatprep.subr.bf16.mxu0 0
    %250 = vmatpush1.bf16.msra.mxu0 %v227
    %251 = vmatprep.subr.bf16.mxu0 0
    %252 = vmatpush1.bf16.msra.mxu0 %v228
    %253 = vmatprep.subr.bf16.mxu0 0
    %254 = vmatpush1.bf16.msra.mxu0 0
    %255 = vmatprep.subr.bf16.mxu0 0
    %256 = vmatpush1.bf16.msra.mxu0 0
    %257 = vmatprep.subr.bf16.mxu0 0
    %258 = vmatpush1.bf16.msra.mxu0 0
    %259 = vmatprep.subr.bf16.mxu0 0
    %260 = vmatpush1.bf16.msra.mxu0 0
    %261 = vmatprep.subr.bf16.mxu0 0
    %262 = vmatpush1.bf16.msra.mxu0 0
    %263 = vmatprep.subr.bf16.mxu0 0
    %264 = vmatpush1.bf16.msra.mxu0 0
    %265 = vmatprep.subr.bf16.mxu0 0
    %266 = vmatpush1.bf16.msra.mxu0 0
    %267 = vmatprep.subr.bf16.mxu0 0
    %268 = vmatpush1.bf16.msra.mxu0 0
    %269 = vmatprep.mubr.bf16.mxu0 0
    %270 = vmatmul.mubr.bf16.gmra.mrb[0].mxu0 %v172
    %v271 = vpop.f32.mrb[0].mxu0
    %v272 = vadd.f32 0.0, %v271
    %v273 = vpop.f32.mrb[0].mxu0
    %v274 = vpop.f32.mrb[0].mxu0
    %v275 = vpop.f32.mrb[0].mxu0
    %276 = vdwg.mxu0
    %v277 = vadd.f32 %v171, %v272
    %278 = vst [vmem:[#allocation2] sm:$0xff] %v277
    // Predicated region
    $region34: #{forward.1} parent=1 // pred_check
      %p279 = pneg %p50
    $region35: #{forward.1} parent=1 // pred_check_branch
      %281 = sbr.rel (%p279) target = $region37
    $region36: #{forward.1} parent=1 // pred_region
      %v282 = vld [vmem:[#allocation2] sm:$0xff]
      %v283 = vld [vmem:[%s4] sm:$0x1]
      %v285 = vlaneseq
      %v286 = vshrl.u32 %v285, 7
      %v287 = vsub.s32 0, %v286
      %v288 = vrot.slane %v283, %v287
      %v290 = vadd.f32 %v282, %v288
      %v291 = vmul.f32 %v290, 0.5
      %v292 = vtanh.pop %v291
      %v293 = vmul.f32 %v292, 0.5
      %v294 = vadd.f32 %v293, 0.5
      %295 = vst [vmem:[#allocation8] sm:$0xff] %v294
    $region37: #{forward.1} parent=1 // pred_fallthru
      _
    // Predicated region
    $region38: #{forward.1} parent=1 // pred_check
      _
    $region39: #{forward.1} parent=1 // pred_check_branch
      %297 = sbr.rel (0) target = $region41
    $region40: #{forward.1} parent=1 // pred_region
      %s299 = ssub.s32 128, 128
      %300 = vsyncadd [#allocation5], %s299
      %s302 = sshll.u32 [#allocation8], 4
      %s303 = int_to_ptr.vmem [resolvable:$true] %s302
      %305 = dma.vmem_to_hbm [thread:$0]  %s303, 128, %s5, [#allocation5]
    $region41: #{forward.1} parent=1 // pred_fallthru
      _
    // Predicated region
    $region42: #{forward.1} parent=1 // pred_check
      _
    $region43: #{forward.1} parent=1 // pred_check_branch
      %307 = sbr.rel (0) target = $region45
    $region44: #{forward.1} parent=1 // pred_region
      %308 = dma.done [#allocation5], 128
    $region45: #{forward.1} parent=1 // pred_fallthru
      _
    %309 = vsyncpa [#allocation4], 1
    %310 = vsyncpa [#allocation7], 1
    %311 = vsyncpa [#allocation5], 1

</llo_original>
